<compile_context>
chip_gen: v5e
topology: v5e:2x2
jax: 0.10.0
libtpu: 0.0.40
codegen_flags: <defaults>
</compile_context>

<pallas_src>
import jax
import jax.numpy as jnp
from jax.experimental import pallas as pl
from jax.experimental.pallas import tpu as pltpu


def rmsnorm_kernel(x_ref, w_ref, o_ref, *, eps):
    # x_ref: (TILE_ROWS, H), w_ref: (1, H), o_ref: (TILE_ROWS, H)
    # NOTE: for the partial last block, rows beyond the array bound hold
    # undefined data; all math below is strictly per-row (reduction only along
    # H), so garbage rows cannot contaminate valid rows, and Pallas drops their
    # out-of-bounds writes.
    x_in = x_ref[...]
    input_dtype = x_in.dtype
    x = x_in.astype(jnp.float32)
    variance = jnp.mean(x * x, axis=-1, keepdims=True)
    inv = jax.lax.rsqrt(variance + eps)  # EUP slot, effectively free
    w = w_ref[...]
    if input_dtype == jnp.float32:
        # Single fp32 pass (no cast round-trip).
        out = x * inv * w.astype(jnp.float32)
    else:
        # Match torch module exactly: weight * normed.to(input_dtype)
        normed = (x * inv).astype(input_dtype)
        out = w.astype(jnp.float32) * normed.astype(jnp.float32)
    o_ref[...] = out.astype(o_ref.dtype)


def _tpu_params():
    """(per-TC VMEM bytes, #TensorCores per chip) with safe fallbacks."""
    vmem_cap = None
    num_tc = 1
    kind = ""
    try:
        kind = jax.devices()[0].device_kind.lower()
    except Exception:
        pass
    if "v7" in kind:
        num_tc = 2
    try:
        vmem_cap = int(getattr(pltpu.get_tpu_info(), "vmem_capacity_bytes"))
    except Exception:
        vmem_cap = None
    if vmem_cap is None:
        # Per-generation table for AOT/off-device tracing paths.
        if "v7" in kind:
            vmem_cap = 64 << 20
        elif ("v5" in kind) or ("v6" in kind):
            vmem_cap = 128 << 20
        else:
            vmem_cap = 64 << 20  # conservative default
    return vmem_cap, num_tc


def _choose_tile_rows(rows, H, in_dtype, out_dtype, vmem_cap, num_tc):
    """Largest sensible row tile: VMEM fit vs. per-step traffic vs. pipelining."""
    in_b = jnp.dtype(in_dtype).itemsize
    out_b = jnp.dtype(out_dtype).itemsize
    sub = 16 if min(in_b, out_b) == 2 else 8  # sublane packing alignment

    if rows <= sub:
        return rows  # block dim == full array dim is always legal

    row_bytes = H * (in_b + out_b)  # in + out HBM traffic per row

    # (a) VMEM fit: double-buffered in + out tiles within ~2/3 of per-TC VMEM
    #     (weight block + compiler scratch ride in the remaining headroom).
    fit_rows = max((vmem_cap * 2 // 3) // max(2 * row_bytes, 1), sub)

    # (b) Pipelining: aim for >= 4 grid steps per TensorCore so DMA-in /
    #     compute / DMA-out overlap (v7x shards the parallel axis over 2 TCs).
    pipe_rows = pl.cdiv(rows, 4 * num_tc)

    # (c) Per-step HBM-traffic floor so the ~0.35us step overhead stays small:
    #     ~16 MiB/step on single-TC v5e/v6e, ~8 MiB/step on v7x (favor steps).
    floor_bytes = (8 << 20) if num_tc >= 2 else (16 << 20)
    floor_rows = max(floor_bytes // max(row_bytes, 1), sub)

    tile = min(fit_rows, max(pipe_rows, floor_rows))
    tile = min(tile, rows)
    tile = max(sub, (tile // sub) * sub)
    return int(tile)


def rmsnorm(hidden_states, weight, eps=1e-6, *, tile_rows=None, out_dtype=None):
    """hidden_states: (..., H); weight: (H,). Matches torch RMSNorm.forward.

    out_dtype=None keeps strict torch promotion (weight.dtype x input dtype).
    Pass out_dtype=hidden_states.dtype to halve write traffic for bf16
    activations with an fp32 weight (semantics deviate from torch promotion).
    """
    orig_shape = hidden_states.shape
    H = orig_shape[-1]
    x2d = hidden_states.reshape(-1, H)
    rows = x2d.shape[0]

    if out_dtype is None:
        # Torch promotion: weight * x.to(input_dtype)
        out_dtype = jnp.result_type(weight.dtype, hidden_states.dtype)

    vmem_cap, num_tc = _tpu_params()
    if tile_rows is None:
        tile_rows = _choose_tile_rows(rows, H, x2d.dtype, out_dtype, vmem_cap, num_tc)
    tile_rows = min(tile_rows, rows)

    w2d = weight.reshape(1, H)
    grid = (pl.cdiv(rows, tile_rows),)  # partial last block handled by Pallas

    in_b = jnp.dtype(x2d.dtype).itemsize
    out_b = jnp.dtype(out_dtype).itemsize
    w_b = jnp.dtype(weight.dtype).itemsize

    # Scoped VMEM: double-buffered in + out tiles + weight + headroom.
    needed = (2 * tile_rows * H * (in_b + out_b) + 2 * H * max(w_b, 4) + (4 << 20))
    vmem_limit = int(min(int(vmem_cap * 0.9), max(needed, 16 << 20)))

    cost = pl.CostEstimate(
        flops=3 * rows * H,
        transcendentals=rows,
        bytes_accessed=rows * H * (in_b + out_b) + H * w_b,
    )

    out = pl.pallas_call(
        lambda x_ref, w_ref, o_ref: rmsnorm_kernel(x_ref, w_ref, o_ref, eps=eps),
        out_shape=jax.ShapeDtypeStruct((rows, H), out_dtype),
        grid_spec=pltpu.PrefetchScalarGridSpec(
            num_scalar_prefetch=0,
            grid=grid,
            in_specs=[
                pl.BlockSpec((tile_rows, H), lambda i: (i, 0)),
                pl.BlockSpec((1, H), lambda i: (0, 0)),
            ],
            out_specs=pl.BlockSpec((tile_rows, H), lambda i: (i, 0)),
        ),
        compiler_params=pltpu.CompilerParams(
            dimension_semantics=("parallel",),
            vmem_limit_bytes=vmem_limit,
        ),
        cost_estimate=cost,
    )(x2d, w2d)

    return out.reshape(orig_shape[:-1] + (H,))


def rmsnorm_ref(hidden_states, weight, eps=1e-6):
    input_dtype = hidden_states.dtype
    x = hidden_states.astype(jnp.float32)
    variance = jnp.mean(x * x, axis=-1, keepdims=True)
    x = x * jax.lax.rsqrt(variance + eps)
    return weight * x.astype(input_dtype)


if __name__ == "__main__":
    key = jax.random.PRNGKey(0)
    batch, seq, hidden = 2, 8, 32

    kx, kw = jax.random.split(key)
    x = jax.random.normal(kx, (batch, seq, hidden), dtype=jnp.float32)
    # Module __init__ uses ones(hidden_size); perturb deterministically so the
    # weight multiply is actually exercised.
    weight = jnp.ones((hidden,), dtype=jnp.float32) + 0.1 * jax.random.normal(
        kw, (hidden,), dtype=jnp.float32
    )

    out = jax.block_until_ready(rmsnorm(x, weight, eps=1e-6))
    ref = rmsnorm_ref(x, weight, eps=1e-6)
    assert out.shape == x.shape and out.dtype == ref.dtype
    assert jnp.allclose(out, ref, atol=1e-5, rtol=1e-5), "mismatch vs reference"

    # Non-divisible row count: exercises the masked partial last block
    # (no wrapper-side padding / slicing anymore).
    x2 = jax.random.normal(key, (3, 7, hidden), dtype=jnp.float32)
    out2 = jax.block_until_ready(rmsnorm(x2, weight, eps=1e-6))
    ref2 = rmsnorm_ref(x2, weight, eps=1e-6)
    assert jnp.allclose(out2, ref2, atol=1e-5, rtol=1e-5), "mismatch (partial block)"

    # bf16 activations, fp32 weight: exercises the cast-round-trip branch and
    # torch-style fp32 output promotion.
    x3 = jax.random.normal(kx, (batch, seq, hidden), dtype=jnp.bfloat16)
    out3 = jax.block_until_ready(rmsnorm(x3, weight, eps=1e-6))
    ref3 = rmsnorm_ref(x3, weight, eps=1e-6)
    assert out3.dtype == ref3.dtype
    assert jnp.allclose(out3, ref3, atol=1e-2, rtol=1e-2), "mismatch (bf16 path)"

    print("KERNEL_OK")
</pallas_src>

<mosaic_0001>
module attributes {stable_mosaic.version = 11 : i64} {
  func.func @_lambda_(%arg0: i32, %arg1: memref<16x32xf32, #tpu.memory_space<vmem>>, %arg2: memref<1x32xf32, #tpu.memory_space<vmem>>, %arg3: memref<16x32xf32, #tpu.memory_space<vmem>>) attributes {dimension_semantics = [#tpu.dimension_semantics<parallel>], iteration_bounds = array<i64: 1>, scalar_prefetch = 0 : i64, scratch_operands = 0 : i64, tpu.core_type = #tpu.core_type<tc>, window_params = [{transform_indices = @transform_0, window_bounds = array<i64: 16, 32>}, {pipeline_mode = #tpu.pipeline_mode<synchronous>, transform_indices = @transform_1, window_bounds = array<i64: 1, 32>}, {transform_indices = @transform_2, window_bounds = array<i64: 16, 32>}]} {
    %c0 = arith.constant 0 : index
    %c0_0 = arith.constant 0 : index
    %0 = vector.load %arg1[%c0, %c0_0] : memref<16x32xf32, #tpu.memory_space<vmem>>, vector<16x32xf32>
    %1 = arith.mulf %0, %0 : vector<16x32xf32>
    %cst = arith.constant dense<0.000000e+00> : vector<16xf32>
    %2 = vector.multi_reduction <add>, %1, %cst [1] : vector<16x32xf32> to vector<16xf32>
    %3 = vector.shape_cast %2 : vector<16xf32> to vector<16x1xf32>
    %cst_1 = arith.constant 3.200000e+01 : f32
    %4 = vector.broadcast %cst_1 : f32 to vector<16x1xf32>
    %5 = arith.divf %3, %4 : vector<16x1xf32>
    %cst_2 = arith.constant 9.99999997E-7 : f32
    %6 = vector.broadcast %cst_2 : f32 to vector<16x1xf32>
    %7 = arith.addf %5, %6 : vector<16x1xf32>
    %8 = math.rsqrt %7 : vector<16x1xf32>
    %c0_3 = arith.constant 0 : index
    %c0_4 = arith.constant 0 : index
    %9 = vector.load %arg2[%c0_3, %c0_4] : memref<1x32xf32, #tpu.memory_space<vmem>>, vector<1x32xf32>
    %10 = vector.broadcast %8 : vector<16x1xf32> to vector<16x32xf32>
    %11 = arith.mulf %0, %10 : vector<16x32xf32>
    %12 = vector.broadcast %9 : vector<1x32xf32> to vector<16x32xf32>
    %13 = arith.mulf %11, %12 : vector<16x32xf32>
    %c0_5 = arith.constant 0 : index
    %c0_6 = arith.constant 0 : index
    %14 = vector.load %arg3[%c0_5, %c0_6] : memref<16x32xf32, #tpu.memory_space<vmem>>, vector<16x32xf32>
    tpu.vector_store %arg3[%c0_5, %c0_6], %13 {strides = array<i32>} : memref<16x32xf32, #tpu.memory_space<vmem>>, vector<16x32xf32>,
    return
  }
  func.func @transform_0(%arg0: i32) -> (i32, i32) {
    %c0_i32 = arith.constant 0 : i32
    %c0_i32_0 = arith.constant 0 : i32
    return %arg0, %c0_i32 : i32, i32
  }
  func.func @transform_1(%arg0: i32) -> (i32, i32) {
    %c0_i32 = arith.constant 0 : i32
    %c0_i32_0 = arith.constant 0 : i32
    %c0_i32_1 = arith.constant 0 : i32
    return %c0_i32, %c0_i32_0 : i32, i32
  }
  func.func @transform_2(%arg0: i32) -> (i32, i32) {
    %c0_i32 = arith.constant 0 : i32
    %c0_i32_0 = arith.constant 0 : i32
    return %arg0, %c0_i32 : i32, i32
  }
}

</mosaic_0001>

<llo_original>
// kernel: tpu_custom_call.1
$region0: #{tpu_custom_call.1}
  #allocation0 [shape = 'u32[]', space=smem, size = 0x4, offset = 0x4, fixed_abs, tag = 'smem constant byte address 0x4 - core index']
  #allocation1 [shape = 'u32[72,128]{1,0:T(1,128)}', space=vmem, size = 0x9000, scoped, tag = 'internal scratch']
  %s0 = inlined_call_operand.hbm [shape: f32[16,32], index: 0, kind: input, shape index: {}]
  %s1 = inlined_call_operand.hbm [shape: f32[1,32], index: 1, kind: input, shape index: {}]
  %s2 = inlined_call_operand.hbm [shape: f32[16,32], index: 2, kind: output, shape index: {}]
  %s3 = sld [smem:[#allocation0]]
  $region26: #{tpu_custom_call.1} parent=0
    _
  %s5 = ssub.s32 1, %s3
  %s6 = scalar_select 0, %s5, %s3
  $region1: #{tpu_custom_call.1} parent=0
    #allocation2 [shape = 'u8[8192]{0}', space=vmem, size = 0x2000, scoped, tag = 'input window, operand 0, single buffered']
    #allocation3 [shape = 's32[1]{0}', space=sflag, size = 0x4, scoped, tag = 'scoped memory for tpu_custom_call.1']
    #allocation4 [shape = 's32[1]{0}', space=sflag, size = 0x4, scoped, tag = 'scoped memory for tpu_custom_call.1']
    #allocation5 [shape = 'u8[512]{0}', space=vmem, size = 0x400, scoped, tag = 'input window, operand 1, single buffered']
    #allocation6 [shape = 's32[1]{0}', space=sflag, size = 0x4, scoped, tag = 'scoped memory for tpu_custom_call.1']
    #allocation7 [shape = 'u8[8192]{0}', space=vmem, size = 0x2000, scoped, tag = 'output window, operand 0, single buffered']
    %7 = vsyncpa [#allocation3], 0
    %8 = vsyncpa [#allocation6], 0
    %9 = vsyncpa [#allocation4], 0
    // Predicated region
    $region2: #{tpu_custom_call.1} parent=1 // pred_check
      _
    $region3: #{tpu_custom_call.1} parent=1 // pred_check_branch
      %11 = sbr.rel (0) target = $region5
    $region4: #{tpu_custom_call.1} parent=1 // pred_region
      %13 = vsyncadd [#allocation3], 0
      %s14 = sshll.u32 %s0, 4
      %s15 = int_to_ptr.hbm [resolvable:$true] %s14
      %s16 = sshll.u32 [#allocation2], 4
      %s17 = int_to_ptr.vmem [resolvable:$true] %s16
      %22 = dma.hbm_to_vmem [thread:$0]  %s15, 256, %s17, [#allocation3], 128, 128, 8
    $region5: #{tpu_custom_call.1} parent=1 // pred_fallthru
      _
    // Predicated region
    $region6: #{tpu_custom_call.1} parent=1 // pred_check
      _
    $region7: #{tpu_custom_call.1} parent=1 // pred_check_branch
      %24 = sbr.rel (0) target = $region9
    $region8: #{tpu_custom_call.1} parent=1 // pred_region
      %26 = vsyncadd [#allocation6], 0
      %s28 = sshll.u32 %s1, 4
      %s29 = int_to_ptr.hbm [resolvable:$true] %s28
      %s30 = sshll.u32 [#allocation5], 4
      %s31 = int_to_ptr.vmem [resolvable:$true] %s30
      %33 = dma.hbm_to_vmem [thread:$0]  %s29, 16, %s31, [#allocation6]
    $region9: #{tpu_custom_call.1} parent=1 // pred_fallthru
      _
    // Predicated region
    $region10: #{tpu_custom_call.1} parent=1 // pred_check
      _
    $region11: #{tpu_custom_call.1} parent=1 // pred_check_branch
      %35 = sbr.rel (0) target = $region13
    $region12: #{tpu_custom_call.1} parent=1 // pred_region
      %37 = dma.done [#allocation3], 256
    $region13: #{tpu_custom_call.1} parent=1 // pred_fallthru
      _
    // Predicated region
    $region14: #{tpu_custom_call.1} parent=1 // pred_check
      _
    $region15: #{tpu_custom_call.1} parent=1 // pred_check_branch
      %39 = sbr.rel (0) target = $region17
    $region16: #{tpu_custom_call.1} parent=1 // pred_region
      %41 = dma.done [#allocation6], 16
    $region17: #{tpu_custom_call.1} parent=1 // pred_fallthru
      _
    %v42 = vld [vmem:[#allocation2] sm:$0xff]
    %v43 = vld [vmem:[#allocation2 + $0x8] sm:$0xff]
    %v44 = vmul.f32 %v42, %v42
    %v45 = vmul.f32 %v43, %v43
    %vm46 = vcmask 261120
    %v47 = vsel %vm46, %v44, 0.0
    %48 = vadd.xlane.f32.xlu0 %v47
    %v49 = vpop.xlane.xlu0 %48
    %v50 = vsel %vm46, %v45, 0.0
    %51 = vadd.xlane.f32.xlu0 %v50
    %v52 = vpop.xlane.xlu0 %51
    %v53 = vrcp.pop 32.0
    %v54 = vmul.f32 32.0, %v53
    %v55 = vsub.f32 1.0, %v54
    %v56 = vmul.f32 %v53, %v55
    %v57 = vadd.f32 %v53, %v56
    %vm58 = vweird.f32 %v53
    %v59 = vsel %vm58, %v53, %v57
    %v60 = vmul.f32 %v49, %v59
    %v61 = vmul.f32 %v52, %v59
    %v62 = vadd.f32 %v60, 1e-06
    %v63 = vadd.f32 %v61, 1e-06
    %v64 = vrsqrt.pop %v62
    %v65 = vmul.f32 %v64, %v62
    %v66 = vmul.f32 %v65, %v64
    %v67 = vmul.f32 0.5, %v66
    %v68 = vsub.f32 1.5, %v67
    %v69 = vmul.f32 %v64, %v68
    %vm70 = vweird.f32 %v62
    %vm71 = vweird.f32 %v64
    %vm72 = vmor %vm70, %vm71
    %v73 = vsel %vm72, %v64, %v69
    %v74 = vrsqrt.pop %v63
    %v75 = vmul.f32 %v74, %v63
    %v76 = vmul.f32 %v75, %v74
    %v77 = vmul.f32 0.5, %v76
    %v78 = vsub.f32 1.5, %v77
    %v79 = vmul.f32 %v74, %v78
    %vm80 = vweird.f32 %v63
    %vm81 = vweird.f32 %v74
    %vm82 = vmor %vm80, %vm81
    %v83 = vsel %vm82, %v74, %v79
    %v84 = vld [vmem:[#allocation5] sm:$0x1]
    %v85 = vmul.f32 %v42, %v73
    %v86 = vmul.f32 %v43, %v83
    %v88 = vperm.slane %v84, 0
    %v90 = vmul.f32 %v85, %v88
    %v91 = vmul.f32 %v86, %v88
    %92 = vst.msk [vmem:[#allocation7] sm:$0xff] %vm46, %v90
    %93 = vst.msk [vmem:[#allocation7 + $0x8] sm:$0xff] %vm46, %v91
    // Predicated region
    $region18: #{tpu_custom_call.1} parent=1 // pred_check
      _
    $region19: #{tpu_custom_call.1} parent=1 // pred_check_branch
      %95 = sbr.rel (0) target = $region21
    $region20: #{tpu_custom_call.1} parent=1 // pred_region
      %97 = vsyncadd [#allocation4], 0
      %s98 = sshll.u32 [#allocation7], 4
      %s99 = int_to_ptr.vmem [resolvable:$true] %s98
      %s100 = sshll.u32 %s2, 4
      %s101 = int_to_ptr.hbm [resolvable:$true] %s100
      %106 = dma.vmem_to_hbm [thread:$0]  %s99, 256, %s101, [#allocation4], 128, 128, 8
    $region21: #{tpu_custom_call.1} parent=1 // pred_fallthru
      _
    // Predicated region
    $region22: #{tpu_custom_call.1} parent=1 // pred_check
      _
    $region23: #{tpu_custom_call.1} parent=1 // pred_check_branch
      %108 = sbr.rel (0) target = $region25
    $region24: #{tpu_custom_call.1} parent=1 // pred_region
      %110 = dma.done [#allocation4], 256
    $region25: #{tpu_custom_call.1} parent=1 // pred_fallthru
      _
    %111 = vsyncpa [#allocation3], 1
    %112 = vsyncpa [#allocation6], 1
    %113 = vsyncpa [#allocation4], 1

</llo_original>
